<compile_context>
chip_gen: v7x
topology: tpu7x:2x2x1
jax: 0.10.0
libtpu: 0.0.40
codegen_flags: <defaults>
</compile_context>

<pallas_src>
import functools

import jax
import jax.numpy as jnp
from jax.experimental import pallas as pl
from jax.experimental.pallas import tpu as pltpu


def gated_attention_kernel(x_ref, w1_ref, b1_ref, w2t_ref, b2_ref,
                           out_ref, wout_ref, *, tb, n, total_rows, mask_tail):
    tbn = tb * n
    x = x_ref[...]                                             # (tbn, D), input dtype

    if mask_tail:
        # Boundary block: rows past the end of the real array hold unspecified
        # data; zero them so they cannot contaminate the shared matmuls.
        start = pl.program_id(0) * tbn
        row_id = start + jax.lax.broadcasted_iota(jnp.int32, (tbn, 1), 0)
        x = jnp.where(row_id < total_rows, x, jnp.zeros((), x.dtype))

    # (1) fused first layer for BOTH branches: one (tbn, D) @ (D, 2H) MXU matmul.
    #     Columns [:H] = attention branch, [H:] = gate branch.
    h = jnp.tanh(jnp.dot(x, w1_ref[...], preferred_element_type=jnp.float32)
                 + b1_ref[...])                                # (tbn, 2H) f32

    # (2) ONE lane-dense score matmul for all bags:
    #     (2, 2H) contracted with (tbn, 2H) -> (2, tbn).  Row 0 = att, row 1 = gate.
    st = jax.lax.dot_general(
        w2t_ref[...], h,
        dimension_numbers=(((1,), (1,)), ((), ())),
        preferred_element_type=jnp.float32)                    # (2, tbn)
    s = (st[0:1, :] + b2_ref[0]) * jax.nn.sigmoid(st[1:2, :] + b2_ref[1])  # (1, tbn)

    # (3) per-bag softmax in flat lane space.  Subtracting the block-wide max is a
    #     constant shift within every bag, so the softmax is unchanged (scores are
    #     tanh-bounded, so no underflow concern).
    s = s - jnp.max(s, axis=-1, keepdims=True)
    e = jnp.exp(s)                                             # (1, tbn)

    # (4) block-diagonal scatter of e: row b holds bag b's exp-scores, zeros elsewhere.
    col = jax.lax.broadcasted_iota(jnp.int32, (tb, tbn), 1)
    row_start = jax.lax.broadcasted_iota(jnp.int32, (tb, tbn), 0) * n
    bag_mask = (col >= row_start) & (col < row_start + n)
    e_blk = jnp.where(bag_mask, e, 0.0)                        # (tb, tbn) f32

    inv = 1.0 / jnp.sum(e_blk, axis=-1, keepdims=True)         # (tb, 1): 1 / softmax denom

    # (5) weighted pooling: ONE (tb, tbn) @ (tbn, D) MXU matmul, ONE dense store.
    pooled = jnp.dot(e_blk.astype(x.dtype), x,
                     preferred_element_type=jnp.float32) * inv
    out_ref[...] = pooled.astype(out_ref.dtype)

    # (6) attention weights, lane-dense (tb, n): fold the block-diagonal rows with
    #     static lane-slice adds (exactly one slice per column is nonzero).
    w_un = e_blk[:, 0:n]
    for k in range(1, tb):
        w_un = w_un + e_blk[:, k * n:(k + 1) * n]
    wout_ref[...] = (w_un * inv).astype(wout_ref.dtype)


def gated_attention(x, params):
    B, N, D = x.shape
    H = params["w2a"].shape[0]
    f32 = jnp.float32

    # ---- one-time parameter packing (plain JAX, outside the kernel) ----------
    w1 = jnp.concatenate([params["w1a"], params["w1g"]], axis=1).astype(x.dtype)   # (D, 2H)
    b1 = jnp.concatenate([params["b1a"], params["b1g"]], axis=1).astype(f32)       # (1, 2H)
    zh = jnp.zeros((1, H), f32)
    w2t = jnp.concatenate(
        [jnp.concatenate([params["w2a"].astype(f32).T, zh], axis=1),   # attention row
         jnp.concatenate([zh, params["w2g"].astype(f32).T], axis=1)],  # gate row
        axis=0)                                                        # (2, 2H)
    b2 = jnp.concatenate([params["b2a"].reshape(-1),
                          params["b2g"].reshape(-1)]).astype(f32)      # (2,) -> SMEM scalars

    # ---- batch tiling: tb bags per (sequential/parallel) grid step ------------
    # tb must be a multiple of 8 (sublane rule for the (tb, D)/(tb, N) output
    # blocks) unless the whole batch fits in a single full block.
    itemsize = x.dtype.itemsize
    per_bag = N * D * itemsize + N * 2 * H * 4 + 16            # x rows + f32 hidden per bag
    tb_fit = max(1, (10 * 2 ** 20) // per_bag)                 # ~10 MiB per x-pipeline buffer
    if B <= 8:
        tb = B                                                 # single full-batch block
    else:
        tb = min(64, B // 2, max(8, tb_fit))                   # >=2 grid steps (v7x megacore)
        tb = max(8, (tb // 8) * 8)

    grid = (pl.cdiv(B, tb),)
    mask_tail = (B % tb) != 0
    x_flat = x.reshape(B * N, D)                               # free layout change in XLA

    # VMEM guard: double-buffered x block + weights + outputs + intermediates,
    # capped at 48 MiB so it is safe on v7x's 64 MiB VMEM (v5e/v6e have 128 MiB).
    tbn = tb * N
    est = (2 * tbn * D * itemsize
           + 2 * (D * 2 * H + 6 * H + 2) * 4
           + 2 * tb * (D + N) * 4
           + 3 * tbn * 2 * H * 4
           + 4 * tb * tbn * 4)
    vmem_limit = int(min(48 * 2 ** 20, max(16 * 2 ** 20, 2 * est)))

    kernel = functools.partial(gated_attention_kernel, tb=tb, n=N,
                               total_rows=B * N, mask_tail=mask_tail)

    out, w = pl.pallas_call(
        kernel,
        out_shape=(
            jax.ShapeDtypeStruct((B, D), jnp.float32),
            jax.ShapeDtypeStruct((B, N), jnp.float32),
        ),
        grid_spec=pltpu.PrefetchScalarGridSpec(
            num_scalar_prefetch=0,
            grid=grid,
            in_specs=[
                pl.BlockSpec((tb * N, D), lambda i: (i, 0)),            # x rows
                pl.BlockSpec((D, 2 * H), lambda i: (0, 0)),             # fused W1
                pl.BlockSpec((1, 2 * H), lambda i: (0, 0)),             # fused b1
                pl.BlockSpec((2, 2 * H), lambda i: (0, 0)),             # fused W2 (transposed)
                pl.BlockSpec(memory_space=pltpu.MemorySpace.SMEM),      # b2a/b2g scalars
            ],
            out_specs=[
                pl.BlockSpec((tb, D), lambda i: (i, 0)),                # pooled features
                pl.BlockSpec((tb, N), lambda i: (i, 0)),                # attention weights
            ],
        ),
        compiler_params=pltpu.CompilerParams(
            dimension_semantics=("parallel",),
            vmem_limit_bytes=vmem_limit,
        ),
    )(x_flat, w1, b1, w2t, b2)

    return out, w


def init_params(key, input_dim, hidden_dim):
    ks = jax.random.split(key, 8)
    s1 = 1.0 / jnp.sqrt(input_dim)
    s2 = 1.0 / jnp.sqrt(hidden_dim)
    return {
        "w1a": jax.random.uniform(ks[0], (input_dim, hidden_dim), jnp.float32, -s1, s1),
        "b1a": jax.random.uniform(ks[1], (1, hidden_dim), jnp.float32, -s1, s1),
        "w2a": jax.random.uniform(ks[2], (hidden_dim, 1), jnp.float32, -s2, s2),
        "b2a": jax.random.uniform(ks[3], (1, 1), jnp.float32, -s2, s2),
        "w1g": jax.random.uniform(ks[4], (input_dim, hidden_dim), jnp.float32, -s1, s1),
        "b1g": jax.random.uniform(ks[5], (1, hidden_dim), jnp.float32, -s1, s1),
        "w2g": jax.random.uniform(ks[6], (hidden_dim, 1), jnp.float32, -s2, s2),
        "b2g": jax.random.uniform(ks[7], (1, 1), jnp.float32, -s2, s2),
    }


def reference(x, p):
    s_a = jnp.tanh(x @ p["w1a"] + p["b1a"]) @ p["w2a"] + p["b2a"]         # (B, N, 1)
    s_g = jax.nn.sigmoid(jnp.tanh(x @ p["w1g"] + p["b1g"]) @ p["w2g"] + p["b2g"])
    w = jax.nn.softmax(s_a * s_g, axis=1)                                 # (B, N, 1)
    out = jnp.einsum("bnd,bn->bd", x, w[..., 0])                          # == (x * w).sum(1)
    return out, w[..., 0]


def _check(B, N, D, H, seed):
    key = jax.random.PRNGKey(seed)
    kx, kp = jax.random.split(key)
    x = jax.random.normal(kx, (B, N, D), jnp.float32)
    params = init_params(kp, D, H)

    out, weights = gated_attention(x, params)
    jax.block_until_ready((out, weights))

    ref_out, ref_w = reference(x, params)
    assert out.shape == (B, D) and weights.shape == (B, N)
    assert jnp.allclose(out, ref_out, atol=2e-5, rtol=2e-5), \
        float(jnp.max(jnp.abs(out - ref_out)))
    assert jnp.allclose(weights, ref_w, atol=2e-5, rtol=2e-5), \
        float(jnp.max(jnp.abs(weights - ref_w)))


if __name__ == "__main__":
    # Small shapes consistent with the module: B bags of N instances, D features.
    _check(B=2, N=8, D=32, H=16, seed=0)    # single full-batch block
    _check(B=11, N=8, D=32, H=16, seed=0)   # multi-step grid + in-kernel tail masking
    print("KERNEL_OK")
</pallas_src>

<mosaic_0001>
module attributes {stable_mosaic.version = 11 : i64} {
  func.func @gated_attention_kernel(%arg0: i32, %arg1: memref<16x32xf32, #tpu.memory_space<vmem>>, %arg2: memref<32x32xf32, #tpu.memory_space<vmem>>, %arg3: memref<1x32xf32, #tpu.memory_space<vmem>>, %arg4: memref<2x32xf32, #tpu.memory_space<vmem>>, %arg5: memref<2xf32, #tpu.memory_space<smem>>, %arg6: memref<2x32xf32, #tpu.memory_space<vmem>>, %arg7: memref<2x8xf32, #tpu.memory_space<vmem>>) attributes {dimension_semantics = [#tpu.dimension_semantics<parallel>], iteration_bounds = array<i64: 1>, scalar_prefetch = 0 : i64, scratch_operands = 0 : i64, tpu.core_type = #tpu.core_type<tc>, window_params = [{transform_indices = @transform_0, window_bounds = array<i64: 16, 32>}, {pipeline_mode = #tpu.pipeline_mode<synchronous>, transform_indices = @transform_1, window_bounds = array<i64: 32, 32>}, {pipeline_mode = #tpu.pipeline_mode<synchronous>, transform_indices = @transform_2, window_bounds = array<i64: 1, 32>}, {pipeline_mode = #tpu.pipeline_mode<synchronous>, transform_indices = @transform_3, window_bounds = array<i64: 2, 32>}, {transform_indices = @transform_4, window_bounds = array<i64: 2>}, {transform_indices = @transform_5, window_bounds = array<i64: 2, 32>}, {transform_indices = @transform_6, window_bounds = array<i64: 2, 8>}]} {
    %c0 = arith.constant 0 : index
    %c0_0 = arith.constant 0 : index
    %0 = vector.load %arg1[%c0, %c0_0] : memref<16x32xf32, #tpu.memory_space<vmem>>, vector<16x32xf32>
    %c0_1 = arith.constant 0 : index
    %c0_2 = arith.constant 0 : index
    %1 = vector.load %arg2[%c0_1, %c0_2] : memref<32x32xf32, #tpu.memory_space<vmem>>, vector<32x32xf32>
    %cst = arith.constant dense<0.000000e+00> : vector<16x32xf32>
    %2 = tpu.matmul %0, %1, %cst {dimension_numbers = #tpu.dot_dimension_numbers<[1], [0], [0], [1], [0, 0, 1, 1], [], []>} : vector<16x32xf32>, vector<32x32xf32>, vector<16x32xf32> -> vector<16x32xf32>
    %c0_3 = arith.constant 0 : index
    %c0_4 = arith.constant 0 : index
    %3 = vector.load %arg3[%c0_3, %c0_4] : memref<1x32xf32, #tpu.memory_space<vmem>>, vector<1x32xf32>
    %4 = vector.broadcast %3 : vector<1x32xf32> to vector<16x32xf32>
    %5 = arith.addf %2, %4 : vector<16x32xf32>
    %6 = math.tanh %5 : vector<16x32xf32>
    %c0_5 = arith.constant 0 : index
    %c0_6 = arith.constant 0 : index
    %7 = vector.load %arg4[%c0_5, %c0_6] : memref<2x32xf32, #tpu.memory_space<vmem>>, vector<2x32xf32>
    %cst_7 = arith.constant dense<0.000000e+00> : vector<2x16xf32>
    %8 = tpu.matmul %7, %6, %cst_7 {dimension_numbers = #tpu.dot_dimension_numbers<[1], [1], [0], [0], [0, 0, 1, 0], [], []>} : vector<2x32xf32>, vector<16x32xf32>, vector<2x16xf32> -> vector<2x16xf32>
    %9 = vector.extract_strided_slice %8 {offsets = [0, 0], sizes = [1, 16], strides = [1, 1]} : vector<2x16xf32> to vector<1x16xf32>
    %c0_8 = arith.constant 0 : index
    %10 = memref.load %arg5[%c0_8] : memref<2xf32, #tpu.memory_space<smem>>
    %11 = vector.broadcast %10 : f32 to vector<1x16xf32>
    %12 = arith.addf %9, %11 : vector<1x16xf32>
    %13 = vector.extract_strided_slice %8 {offsets = [1, 0], sizes = [1, 16], strides = [1, 1]} : vector<2x16xf32> to vector<1x16xf32>
    %c1 = arith.constant 1 : index
    %14 = memref.load %arg5[%c1] : memref<2xf32, #tpu.memory_space<smem>>
    %15 = vector.broadcast %14 : f32 to vector<1x16xf32>
    %16 = arith.addf %13, %15 : vector<1x16xf32>
    %17 = arith.negf %16 : vector<1x16xf32>
    %18 = math.exp %17 : vector<1x16xf32>
    %cst_9 = arith.constant 1.000000e+00 : f32
    %19 = vector.broadcast %cst_9 : f32 to vector<1x16xf32>
    %20 = arith.addf %19, %18 : vector<1x16xf32>
    %21 = arith.divf %19, %20 : vector<1x16xf32>
    %22 = arith.mulf %12, %21 : vector<1x16xf32>
    %cst_10 = arith.constant dense<0xFF800000> : vector<1xf32>
    %23 = vector.multi_reduction <maximumf>, %22, %cst_10 [1] : vector<1x16xf32> to vector<1xf32>
    %24 = vector.shape_cast %23 : vector<1xf32> to vector<1x1xf32>
    %25 = vector.broadcast %24 : vector<1x1xf32> to vector<1x16xf32>
    %26 = arith.subf %22, %25 : vector<1x16xf32>
    %27 = math.exp %26 : vector<1x16xf32>
    %28 = tpu.iota {dimensions = array<i32: 1>} : vector<2x16xi32>
    %29 = tpu.iota {dimensions = array<i32: 0>} : vector<2x16xi32>
    %c8_i32 = arith.constant 8 : i32
    %30 = vector.broadcast %c8_i32 : i32 to vector<2x16xi32>
    %31 = arith.muli %29, %30 : vector<2x16xi32>
    %32 = arith.cmpi sge, %28, %31 : vector<2x16xi32>
    %c8_i32_11 = arith.constant 8 : i32
    %33 = vector.broadcast %c8_i32_11 : i32 to vector<2x16xi32>
    %34 = arith.addi %31, %33 : vector<2x16xi32>
    %35 = arith.cmpi slt, %28, %34 : vector<2x16xi32>
    %36 = arith.andi %32, %35 : vector<2x16xi1>
    %cst_12 = arith.constant 0.000000e+00 : f32
    %37 = vector.shape_cast %27 : vector<1x16xf32> to vector<1x16xf32>
    %38 = vector.broadcast %37 : vector<1x16xf32> to vector<2x16xf32>
    %39 = vector.broadcast %cst_12 : f32 to vector<2x16xf32>
    %40 = arith.select %36, %38, %39 : vector<2x16xi1>, vector<2x16xf32>
    %cst_13 = arith.constant dense<0.000000e+00> : vector<2xf32>
    %41 = vector.multi_reduction <add>, %40, %cst_13 [1] : vector<2x16xf32> to vector<2xf32>
    %42 = vector.shape_cast %41 : vector<2xf32> to vector<2x1xf32>
    %cst_14 = arith.constant 1.000000e+00 : f32
    %43 = vector.broadcast %cst_14 : f32 to vector<2x1xf32>
    %44 = arith.divf %43, %42 : vector<2x1xf32>
    %cst_15 = arith.constant dense<0.000000e+00> : vector<2x32xf32>
    %45 = tpu.matmul %40, %0, %cst_15 {dimension_numbers = #tpu.dot_dimension_numbers<[1], [0], [0], [1], [0, 0, 1, 1], [], []>} : vector<2x16xf32>, vector<16x32xf32>, vector<2x32xf32> -> vector<2x32xf32>
    %46 = vector.broadcast %44 : vector<2x1xf32> to vector<2x32xf32>
    %47 = arith.mulf %45, %46 : vector<2x32xf32>
    %c0_16 = arith.constant 0 : index
    %c0_17 = arith.constant 0 : index
    %48 = vector.load %arg6[%c0_16, %c0_17] : memref<2x32xf32, #tpu.memory_space<vmem>>, vector<2x32xf32>
    tpu.vector_store %arg6[%c0_16, %c0_17], %47 {strides = array<i32>} : memref<2x32xf32, #tpu.memory_space<vmem>>, vector<2x32xf32>,
    %49 = vector.extract_strided_slice %40 {offsets = [0, 0], sizes = [2, 8], strides = [1, 1]} : vector<2x16xf32> to vector<2x8xf32>
    %50 = vector.extract_strided_slice %40 {offsets = [0, 8], sizes = [2, 8], strides = [1, 1]} : vector<2x16xf32> to vector<2x8xf32>
    %51 = arith.addf %49, %50 : vector<2x8xf32>
    %52 = vector.broadcast %44 : vector<2x1xf32> to vector<2x8xf32>
    %53 = arith.mulf %51, %52 : vector<2x8xf32>
    %c0_18 = arith.constant 0 : index
    %c0_19 = arith.constant 0 : index
    %54 = vector.load %arg7[%c0_18, %c0_19] : memref<2x8xf32, #tpu.memory_space<vmem>>, vector<2x8xf32>
    tpu.vector_store %arg7[%c0_18, %c0_19], %53 {strides = array<i32>} : memref<2x8xf32, #tpu.memory_space<vmem>>, vector<2x8xf32>,
    return
  }
  func.func @transform_0(%arg0: i32) -> (i32, i32) {
    %c0_i32 = arith.constant 0 : i32
    %c0_i32_0 = arith.constant 0 : i32
    return %arg0, %c0_i32 : i32, i32
  }
  func.func @transform_1(%arg0: i32) -> (i32, i32) {
    %c0_i32 = arith.constant 0 : i32
    %c0_i32_0 = arith.constant 0 : i32
    %c0_i32_1 = arith.constant 0 : i32
    return %c0_i32, %c0_i32_0 : i32, i32
  }
  func.func @transform_2(%arg0: i32) -> (i32, i32) {
    %c0_i32 = arith.constant 0 : i32
    %c0_i32_0 = arith.constant 0 : i32
    %c0_i32_1 = arith.constant 0 : i32
    return %c0_i32, %c0_i32_0 : i32, i32
  }
  func.func @transform_3(%arg0: i32) -> (i32, i32) {
    %c0_i32 = arith.constant 0 : i32
    %c0_i32_0 = arith.constant 0 : i32
    %c0_i32_1 = arith.constant 0 : i32
    return %c0_i32, %c0_i32_0 : i32, i32
  }
  func.func @transform_4(%arg0: i32) -> i32 {
    %c0_i32 = arith.constant 0 : i32
    %c0_i32_0 = arith.constant 0 : i32
    return %c0_i32 : i32
  }
  func.func @transform_5(%arg0: i32) -> (i32, i32) {
    %c0_i32 = arith.constant 0 : i32
    %c0_i32_0 = arith.constant 0 : i32
    return %arg0, %c0_i32 : i32, i32
  }
  func.func @transform_6(%arg0: i32) -> (i32, i32) {
    %c0_i32 = arith.constant 0 : i32
    %c0_i32_0 = arith.constant 0 : i32
    return %arg0, %c0_i32 : i32, i32
  }
}

</mosaic_0001>

<llo_original>
// kernel: tpu_custom_call.1
$region0: #{tpu_custom_call.1}
  #allocation0 [shape = 'u32[]', space=smem, size = 0x4, offset = 0x4, fixed_abs, tag = 'smem constant byte address 0x4 - core index']
  #allocation1 [shape = 'u32[144,128]{1,0:T(1,128)}', space=vmem, size = 0x12000, scoped, tag = 'internal scratch']
  %s0 = inlined_call_operand.hbm [shape: f32[16,32], index: 0, kind: input, shape index: {}]
  %s1 = inlined_call_operand.hbm [shape: f32[32,32], index: 1, kind: input, shape index: {}]
  %s2 = inlined_call_operand.vmem [shape: f32[1,32], index: 2, kind: input, shape index: {}]
  %s3 = inlined_call_operand.vmem [shape: f32[2,32], index: 3, kind: input, shape index: {}]
  %s4 = inlined_call_operand.vmem [shape: f32[2], index: 4, kind: input, shape index: {}]
  %s5 = inlined_call_operand.hbm [shape: f32[2,32], index: 5, kind: output, shape index: {0}]
  %s6 = inlined_call_operand.hbm [shape: f32[2,8], index: 6, kind: output, shape index: {1}]
  %7 = xla_tuple %s5, %s6
  %s8 = sld [smem:[#allocation0]]
  $region50: #{tpu_custom_call.1} parent=0
    _
  %s10 = ssub.s32 1, %s8
  %s11 = scalar_select 0, %s10, %s8
  $region1: #{tpu_custom_call.1} parent=0
    #allocation2 [shape = 'u8[8192]{0}', space=vmem, size = 0x2000, scoped, tag = 'input window, operand 0, single buffered']
    #allocation3 [shape = 's32[1]{0}', space=sflag, size = 0x4, scoped, tag = 'scoped memory for tpu_custom_call.1']
    #allocation4 [shape = 's32[1]{0}', space=sflag, size = 0x4, scoped, tag = 'scoped memory for tpu_custom_call.1']
    #allocation5 [shape = 's32[1]{0}', space=sflag, size = 0x4, scoped, tag = 'scoped memory for tpu_custom_call.1']
    #allocation6 [shape = 'u8[16384]{0}', space=vmem, size = 0x4000, scoped, tag = 'input window, operand 1, single buffered']
    #allocation7 [shape = 's32[1]{0}', space=sflag, size = 0x4, scoped, tag = 'scoped memory for tpu_custom_call.1']
    #allocation8 [shape = 'u8[512]{0}', space=smem, size = 0x200, scoped, tag = 'input window, operand 4, single buffered']
    #allocation9 [shape = 'u8[1024]{0}', space=vmem, size = 0x400, scoped, tag = 'output window, operand 0, single buffered']
    #allocation10 [shape = 'u8[1024]{0}', space=vmem, size = 0x400, scoped, tag = 'output window, operand 1, single buffered']
    #allocation11 [shape = 's32[1]{0}', space=sflag, size = 0x4, scoped, tag = 'scoped memory for tpu_custom_call.1']
    %12 = vsyncpa [#allocation3], 0
    %13 = vsyncpa [#allocation7], 0
    %14 = vsyncpa [#allocation5], 0
    %15 = vsyncpa [#allocation4], 0
    %16 = vsyncpa [#allocation11], 0
    // Predicated region
    $region2: #{tpu_custom_call.1} parent=1 // pred_check
      _
    $region3: #{tpu_custom_call.1} parent=1 // pred_check_branch
      %18 = sbr.rel (0) target = $region5
    $region4: #{tpu_custom_call.1} parent=1 // pred_region
      %s20 = ssub.s32 256, 256
      %21 = vsyncadd [#allocation3], %s20
      %s22 = sshll.u32 [#allocation2], 4
      %s23 = int_to_ptr.vmem [resolvable:$true] %s22
      %28 = dma.hbm_to_vmem [thread:$0]  %s0, 256, %s23, [#allocation3], 128, 128, 8
    $region5: #{tpu_custom_call.1} parent=1 // pred_fallthru
      _
    // Predicated region
    $region6: #{tpu_custom_call.1} parent=1 // pred_check
      _
    $region7: #{tpu_custom_call.1} parent=1 // pred_check_branch
      %30 = sbr.rel (0) target = $region9
    $region8: #{tpu_custom_call.1} parent=1 // pred_region
      %s32 = ssub.s32 512, 512
      %33 = vsyncadd [#allocation7], %s32
      %s34 = sshll.u32 [#allocation6], 4
      %s35 = int_to_ptr.vmem [resolvable:$true] %s34
      %40 = dma.hbm_to_vmem [thread:$0]  %s1, 512, %s35, [#allocation7], 128, 128, 8
    $region9: #{tpu_custom_call.1} parent=1 // pred_fallthru
      _
    // Predicated region
    $region10: #{tpu_custom_call.1} parent=1 // pred_check
      _
    $region11: #{tpu_custom_call.1} parent=1 // pred_check_branch
      %42 = sbr.rel (0) target = $region13
    $region12: #{tpu_custom_call.1} parent=1 // pred_region
      _
    $region13: #{tpu_custom_call.1} parent=1 // pred_fallthru
      _
    // Predicated region
    $region14: #{tpu_custom_call.1} parent=1 // pred_check
      _
    $region15: #{tpu_custom_call.1} parent=1 // pred_check_branch
      %44 = sbr.rel (0) target = $region17
    $region16: #{tpu_custom_call.1} parent=1 // pred_region
      _
    $region17: #{tpu_custom_call.1} parent=1 // pred_fallthru
      _
    // Predicated region
    $region18: #{tpu_custom_call.1} parent=1 // pred_check
      _
    $region19: #{tpu_custom_call.1} parent=1 // pred_check_branch
      %46 = sbr.rel (0) target = $region21
    $region20: #{tpu_custom_call.1} parent=1 // pred_region
      %s48 = ssub.s32 16, 16
      %49 = vsyncadd [#allocation5], %s48
      %s51 = sshll.u32 %s4, 4
      %s52 = int_to_ptr.vmem [resolvable:$true] %s51
      %54 = dma.vmem_to_smem %s52, 16, [#allocation8], [#allocation5]
    $region21: #{tpu_custom_call.1} parent=1 // pred_fallthru
      _
    // Predicated region
    $region22: #{tpu_custom_call.1} parent=1 // pred_check
      _
    $region23: #{tpu_custom_call.1} parent=1 // pred_check_branch
      %56 = sbr.rel (0) target = $region25
    $region24: #{tpu_custom_call.1} parent=1 // pred_region
      %57 = dma.done [#allocation3], 256
    $region25: #{tpu_custom_call.1} parent=1 // pred_fallthru
      _
    // Predicated region
    $region26: #{tpu_custom_call.1} parent=1 // pred_check
      _
    $region27: #{tpu_custom_call.1} parent=1 // pred_check_branch
      %59 = sbr.rel (0) target = $region29
    $region28: #{tpu_custom_call.1} parent=1 // pred_region
      %60 = dma.done [#allocation7], 512
    $region29: #{tpu_custom_call.1} parent=1 // pred_fallthru
      _
    // Predicated region
    $region30: #{tpu_custom_call.1} parent=1 // pred_check
      _
    $region31: #{tpu_custom_call.1} parent=1 // pred_check_branch
      %62 = sbr.rel (0) target = $region33
    $region32: #{tpu_custom_call.1} parent=1 // pred_region
      %63 = dma.done [#allocation5], 16
    $region33: #{tpu_custom_call.1} parent=1 // pred_fallthru
      _
    %64 = sfence
    %v65 = vld [vmem:[#allocation2] sm:$0xff]
    %v66 = vld [vmem:[#allocation2 + $0x8] sm:$0xff]
    %v67 = vld [vmem:[#allocation6] sm:$0xff]
    %v68 = vld [vmem:[#allocation6 + $0x8] sm:$0xff]
    %v69 = vld [vmem:[#allocation6 + $0x10] sm:$0xff]
    %v70 = vld [vmem:[#allocation6 + $0x18] sm:$0xff]
    %v71 = vld [vmem:[%s2] sm:$0x1]
    %v73 = vlaneseq
    %v74 = vshrl.u32 %v73, 7
    %v75 = vsub.s32 0, %v74
    %v76 = vrot.slane %v71, %v75
    %vm78 = vcmask 261120
    %v80 = vsel %vm78, %v65, 0
    %v83 = vsel %vm78, %v66, 0
    %85 = vmatprep.subr.mxu0 0.0
    %86 = vmatpush1.msra.mxu0 %v67
    %87 = vmatprep.subr.mxu0 0.0
    %88 = vmatpush1.msra.mxu0 %v68
    %89 = vmatprep.subr.mxu0 0.0
    %90 = vmatpush1.msra.mxu0 %v69
    %91 = vmatprep.subr.mxu0 0.0
    %92 = vmatpush1.msra.mxu0 %v70
    %93 = vmatprep.subr.mxu0 0.0
    %94 = vmatpush1.msra.mxu0 0.0
    %95 = vmatprep.subr.mxu0 0.0
    %96 = vmatpush1.msra.mxu0 0.0
    %97 = vmatprep.subr.mxu0 0.0
    %98 = vmatpush1.msra.mxu0 0.0
    %99 = vmatprep.subr.mxu0 0.0
    %100 = vmatpush1.msra.mxu0 0.0
    %101 = vmatprep.subr.mxu0 0.0
    %102 = vmatpush1.msra.mxu0 0.0
    %103 = vmatprep.subr.mxu0 0.0
    %104 = vmatpush1.msra.mxu0 0.0
    %105 = vmatprep.subr.mxu0 0.0
    %106 = vmatpush1.msra.mxu0 0.0
    %107 = vmatprep.subr.mxu0 0.0
    %108 = vmatpush1.msra.mxu0 0.0
    %109 = vmatprep.subr.mxu0 0.0
    %110 = vmatpush1.msra.mxu0 0.0
    %111 = vmatprep.subr.mxu0 0.0
    %112 = vmatpush1.msra.mxu0 0.0
    %113 = vmatprep.subr.mxu0 0.0
    %114 = vmatpush1.msra.mxu0 0.0
    %115 = vmatprep.subr.mxu0 0.0
    %116 = vmatpush1.msra.mxu0 0.0
    %117 = vmatprep.subr.mxu0 0.0
    %118 = vmatpush1.msra.mxu0 0.0
    %119 = vmatprep.subr.mxu0 0.0
    %120 = vmatpush1.msra.mxu0 0.0
    %121 = vmatprep.subr.mxu0 0.0
    %122 = vmatpush1.msra.mxu0 0.0
    %123 = vmatprep.subr.mxu0 0.0
    %124 = vmatpush1.msra.mxu0 0.0
    %125 = vmatprep.subr.mxu0 0.0
    %126 = vmatpush1.msra.mxu0 0.0
    %127 = vmatprep.subr.mxu0 0.0
    %128 = vmatpush1.msra.mxu0 0.0
    %129 = vmatprep.subr.mxu0 0.0
    %130 = vmatpush1.msra.mxu0 0.0
    %131 = vmatprep.subr.mxu0 0.0
    %132 = vmatpush1.msra.mxu0 0.0
    %133 = vmatprep.subr.mxu0 0.0
    %134 = vmatpush1.msra.mxu0 0.0
    %135 = vmatprep.subr.mxu0 0.0
    %136 = vmatpush1.msra.mxu0 0.0
    %137 = vmatprep.subr.mxu0 0.0
    %138 = vmatpush1.msra.mxu0 0.0
    %139 = vmatprep.subr.mxu0 0.0
    %140 = vmatpush1.msra.mxu0 0.0
    %141 = vmatprep.subr.mxu0 0.0
    %142 = vmatpush1.msra.mxu0 0.0
    %143 = vmatprep.subr.mxu0 0.0
    %144 = vmatpush1.msra.mxu0 0.0
    %145 = vmatprep.subr.mxu0 0.0
    %146 = vmatpush1.msra.mxu0 0.0
    %147 = vmatprep.subr.mxu0 0.0
    %148 = vmatpush1.msra.mxu0 0.0
    %149 = vmatprep.mubr.f32.mxu0 0.0
    %150 = vmatmul.mubr.f32.gmra.mrb[0].mxu0 %v80
    %v151 = vpop.f32.mrb[0].mxu0
    %v152 = vadd.f32 %v76, %v151
    %v153 = vpop.f32.mrb[0].mxu0
    %154 = vmatprep.mubr.f32.mxu0 0.0
    %155 = vmatmul.mubr.f32.gmra.mrb[0].mxu0 %v83
    %v156 = vpop.f32.mrb[0].mxu0
    %v157 = vadd.f32 %v76, %v156
    %v158 = vpop.f32.mrb[0].mxu0
    %159 = vdwg.mxu0
    %v160 = vtanh.pop %v152
    %v161 = vtanh.pop %v157
    %v162 = vld [vmem:[%s3] sm:$0x3]
    %v164 = vsel %vm78, %v162, 0
    %v167 = vsel %vm78, %v160, 0
    %v170 = vsel %vm78, %v161, 0
    %172 = vmatprep.subr.mxu0 0.0
    %173 = vmatpush1.xpose.msra.mxu0 %v167
    %174 = vmatprep.subr.mxu0 0.0
    %175 = vmatpush1.xpose.msra.mxu0 %v170
    %176 = vmatprep.subr.mxu0 0.0
    %177 = vmatpush1.xpose.msra.mxu0 0.0
    %178 = vmatprep.subr.mxu0 0.0
    %179 = vmatpush1.xpose.msra.mxu0 0.0
    %180 = vmatprep.subr.mxu0 0.0
    %181 = vmatpush1.xpose.msra.mxu0 0.0
    %182 = vmatprep.subr.mxu0 0.0
    %183 = vmatpush1.xpose.msra.mxu0 0.0
    %184 = vmatprep.subr.mxu0 0.0
    %185 = vmatpush1.xpose.msra.mxu0 0.0
    %186 = vmatprep.subr.mxu0 0.0
    %187 = vmatpush1.xpose.msra.mxu0 0.0
    %188 = vmatprep.subr.mxu0 0.0
    %189 = vmatpush1.xpose.msra.mxu0 0.0
    %190 = vmatprep.subr.mxu0 0.0
    %191 = vmatpush1.xpose.msra.mxu0 0.0
    %192 = vmatprep.subr.mxu0 0.0
    %193 = vmatpush1.xpose.msra.mxu0 0.0
    %194 = vmatprep.subr.mxu0 0.0
    %195 = vmatpush1.xpose.msra.mxu0 0.0
    %196 = vmatprep.subr.mxu0 0.0
    %197 = vmatpush1.xpose.msra.mxu0 0.0
    %198 = vmatprep.subr.mxu0 0.0
    %199 = vmatpush1.xpose.msra.mxu0 0.0
    %200 = vmatprep.subr.mxu0 0.0
    %201 = vmatpush1.xpose.msra.mxu0 0.0
    %202 = vmatprep.subr.mxu0 0.0
    %203 = vmatpush1.xpose.msra.mxu0 0.0
    %204 = vmatprep.subr.mxu0 0.0
    %205 = vmatpush1.xpose.msra.mxu0 0.0
    %206 = vmatprep.subr.mxu0 0.0
    %207 = vmatpush1.xpose.msra.mxu0 0.0
    %208 = vmatprep.subr.mxu0 0.0
    %209 = vmatpush1.xpose.msra.mxu0 0.0
    %210 = vmatprep.subr.mxu0 0.0
    %211 = vmatpush1.xpose.msra.mxu0 0.0
    %212 = vmatprep.subr.mxu0 0.0
    %213 = vmatpush1.xpose.msra.mxu0 0.0
    %214 = vmatprep.subr.mxu0 0.0
    %215 = vmatpush1.xpose.msra.mxu0 0.0
    %216 = vmatprep.subr.mxu0 0.0
    %217 = vmatpush1.xpose.msra.mxu0 0.0
    %218 = vmatprep.subr.mxu0 0.0
    %219 = vmatpush1.xpose.msra.mxu0 0.0
    %220 = vmatprep.subr.mxu0 0.0
    %221 = vmatpush1.xpose.msra.mxu0 0.0
    %222 = vmatprep.subr.mxu0 0.0
    %223 = vmatpush1.xpose.msra.mxu0 0.0
    %224 = vmatprep.subr.mxu0 0.0
    %225 = vmatpush1.xpose.msra.mxu0 0.0
    %226 = vmatprep.subr.mxu0 0.0
    %227 = vmatpush1.xpose.msra.mxu0 0.0
    %228 = vmatprep.subr.mxu0 0.0
    %229 = vmatpush1.xpose.msra.mxu0 0.0
    %230 = vmatprep.subr.mxu0 0.0
    %231 = vmatpush1.xpose.msra.mxu0 0.0
    %232 = vmatprep.subr.mxu0 0.0
    %233 = vmatpush1.xpose.msra.mxu0 0.0
    %234 = vmatprep.subr.mxu0 0.0
    %235 = vmatpush1.xpose.msra.mxu0 0.0
    %236 = vmatprep.mubr.f32.mxu0 0.0
    %237 = vmatmul.mubr.f32.gmra.mrb[0].mxu0 %v164
    %v238 = vpop.f32.mrb[0].mxu0
    %v239 = vadd.f32 0.0, %v238
    %v240 = vpop.f32.mrb[0].mxu0
    %241 = vdwg.mxu0
    %s242 = sld [smem:[#allocation8]]
    %v243 = vstv %s242
    %v244 = vadd.f32 %v239, %v243
    %s245 = sld [smem:[#allocation8 + $0x1]]
    %v246 = vstv %s245
    %v247 = vadd.f32 %v239, %v246
    %v248 = vxor.u32 %v247, 2147483648
    %v249 = vmul.f32 %v248, 1.442695
    %v250 = vpow.pop %v249
    %v251 = vadd.f32 %v250, 1.0
    %v252 = vrcp.pop %v251
    %v253 = vmul.f32 1.0, %v252
    %v255 = vrot.slane %v253, 1
    %v257 = vmul.f32 %v244, %v255
    %vm258 = vcmask 122880
    %v259 = vsel %vm258, %v257, -inf
    %260 = vmax.xlane.f32.xlu0 %v259
    %v261 = vpop.xlane.xlu0 %260
    %v262 = vsub.f32 %v257, %v261
    %v263 = vmul.f32 %v262, 1.442695
    %v264 = vpow.pop %v263
    %v265 = vlaneseq
    %v266 = vand.u32 %v265, 127
    %v267 = vlaneseq
    %v268 = vshrl.u32 %v267, 7
    %v269 = vmul.u32 %v268, 8
    %vm270 = vcmp.ge.s32.totalorder %v266, %v269
    %v271 = vadd.s32 %v269, 8
    %vm272 = vcmp.lt.s32.totalorder %v266, %v271
    %vm273 = vmand %vm270, %vm272
    %v274 = vlaneseq
    %v275 = vshrl.u32 %v274, 7
    %v276 = vsub.s32 0, %v275
    %v277 = vrot.slane %v264, %v276
    %v278 = vsel %vm273, %v277, 0.0
    %vm279 = vcmask 123904
    %v280 = vsel %vm279, %v278, 0.0
    %281 = vadd.xlane.f32.xlu0 %v280
    %v282 = vpop.xlane.xlu0 %281
    %v283 = vrcp.pop %v282
    %v284 = vmul.f32 1.0, %v283
    %vm285 = vcmask 130048
    %v287 = vsel %vm285, %v278, 0
    %289 = vmatprep.subr.mxu0 0.0
    %290 = vmatpush1.msra.mxu0 %v65
    %291 = vmatprep.subr.mxu0 0.0
    %292 = vmatpush1.msra.mxu0 %v66
    %293 = vmatprep.subr.mxu0 0.0
    %294 = vmatpush1.msra.mxu0 0.0
    %295 = vmatprep.subr.mxu0 0.0
    %296 = vmatpush1.msra.mxu0 0.0
    %297 = vmatprep.subr.mxu0 0.0
    %298 = vmatpush1.msra.mxu0 0.0
    %299 = vmatprep.subr.mxu0 0.0
    %300 = vmatpush1.msra.mxu0 0.0
    %301 = vmatprep.subr.mxu0 0.0
    %302 = vmatpush1.msra.mxu0 0.0
    %303 = vmatprep.subr.mxu0 0.0
    %304 = vmatpush1.msra.mxu0 0.0
    %305 = vmatprep.subr.mxu0 0.0
    %306 = vmatpush1.msra.mxu0 0.0
    %307 = vmatprep.subr.mxu0 0.0
    %308 = vmatpush1.msra.mxu0 0.0
    %309 = vmatprep.subr.mxu0 0.0
    %310 = vmatpush1.msra.mxu0 0.0
    %311 = vmatprep.subr.mxu0 0.0
    %312 = vmatpush1.msra.mxu0 0.0
    %313 = vmatprep.subr.mxu0 0.0
    %314 = vmatpush1.msra.mxu0 0.0
    %315 = vmatprep.subr.mxu0 0.0
    %316 = vmatpush1.msra.mxu0 0.0
    %317 = vmatprep.subr.mxu0 0.0
    %318 = vmatpush1.msra.mxu0 0.0
    %319 = vmatprep.subr.mxu0 0.0
    %320 = vmatpush1.msra.mxu0 0.0
    %321 = vmatprep.subr.mxu0 0.0
    %322 = vmatpush1.msra.mxu0 0.0
    %323 = vmatprep.subr.mxu0 0.0
    %324 = vmatpush1.msra.mxu0 0.0
    %325 = vmatprep.subr.mxu0 0.0
    %326 = vmatpush1.msra.mxu0 0.0
    %327 = vmatprep.subr.mxu0 0.0
    %328 = vmatpush1.msra.mxu0 0.0
    %329 = vmatprep.subr.mxu0 0.0
    %330 = vmatpush1.msra.mxu0 0.0
    %331 = vmatprep.subr.mxu0 0.0
    %332 = vmatpush1.msra.mxu0 0.0
    %333 = vmatprep.subr.mxu0 0.0
    %334 = vmatpush1.msra.mxu0 0.0
    %335 = vmatprep.subr.mxu0 0.0
    %336 = vmatpush1.msra.mxu0 0.0
    %337 = vmatprep.subr.mxu0 0.0
    %338 = vmatpush1.msra.mxu0 0.0
    %339 = vmatprep.subr.mxu0 0.0
    %340 = vmatpush1.msra.mxu0 0.0
    %341 = vmatprep.subr.mxu0 0.0
    %342 = vmatpush1.msra.mxu0 0.0
    %343 = vmatprep.subr.mxu0 0.0
    %344 = vmatpush1.msra.mxu0 0.0
    %345 = vmatprep.subr.mxu0 0.0
    %346 = vmatpush1.msra.mxu0 0.0
    %347 = vmatprep.subr.mxu0 0.0
    %348 = vmatpush1.msra.mxu0 0.0
    %349 = vmatprep.subr.mxu0 0.0
    %350 = vmatpush1.msra.mxu0 0.0
    %351 = vmatprep.subr.mxu0 0.0
    %352 = vmatpush1.msra.mxu0 0.0
    %353 = vmatprep.mubr.f32.mxu0 0.0
    %354 = vmatmul.mubr.f32.gmra.mrb[0].mxu0 %v287
    %v355 = vpop.f32.mrb[0].mxu0
    %v356 = vadd.f32 0.0, %v355
    %v357 = vpop.f32.mrb[0].mxu0
    %358 = vdwg.mxu0
    %v359 = vmul.f32 %v356, %v284
    %vm360 = vcmask 254976
    %361 = vst.msk [vmem:[#allocation9] sm:$0x3] %vm360, %v359
    %362 = vrot.lane.b32.xlu0 %v278, 120
    %v363 = vpop.permute.xlu0 %362
    %v365 = vadd.f32 %v278, %v363
    %v366 = vmul.f32 %v365, %v284
    %vm367 = vcmask 58368
    %368 = vst.msk [vmem:[#allocation10] sm:$0x3] %vm367, %v366
    // Predicated region
    $region34: #{tpu_custom_call.1} parent=1 // pred_check
      _
    $region35: #{tpu_custom_call.1} parent=1 // pred_check_branch
      %370 = sbr.rel (0) target = $region37
    $region36: #{tpu_custom_call.1} parent=1 // pred_region
      %s372 = ssub.s32 32, 32
      %373 = vsyncadd [#allocation4], %s372
      %s375 = sshll.u32 [#allocation9], 4
      %s376 = int_to_ptr.vmem [resolvable:$true] %s375
      %378 = dma.vmem_to_hbm [thread:$0]  %s376, 32, %s5, [#allocation4]
    $region37: #{tpu_custom_call.1} parent=1 // pred_fallthru
      _
    // Predicated region
    $region38: #{tpu_custom_call.1} parent=1 // pred_check
      _
    $region39: #{tpu_custom_call.1} parent=1 // pred_check_branch
      %380 = sbr.rel (0) target = $region41
    $region40: #{tpu_custom_call.1} parent=1 // pred_region
      %s382 = ssub.s32 32, 32
      %383 = vsyncadd [#allocation11], %s382
      %s385 = sshll.u32 [#allocation10], 4
      %s386 = int_to_ptr.vmem [resolvable:$true] %s385
      %388 = dma.vmem_to_hbm [thread:$0]  %s386, 32, %s6, [#allocation11]
    $region41: #{tpu_custom_call.1} parent=1 // pred_fallthru
      _
    // Predicated region
    $region42: #{tpu_custom_call.1} parent=1 // pred_check
      _
    $region43: #{tpu_custom_call.1} parent=1 // pred_check_branch
      %390 = sbr.rel (0) target = $region45
    $region44: #{tpu_custom_call.1} parent=1 // pred_region
      %391 = dma.done [#allocation4], 32
    $region45: #{tpu_custom_call.1} parent=1 // pred_fallthru
      _
    // Predicated region
    $region46: #{tpu_custom_call.1} parent=1 // pred_check
      _
    $region47: #{tpu_custom_call.1} parent=1 // pred_check_branch
      %393 = sbr.rel (0) target = $region49
    $region48: #{tpu_custom_call.1} parent=1 // pred_region
      %394 = dma.done [#allocation11], 32
    $region49: #{tpu_custom_call.1} parent=1 // pred_fallthru
      _
    %395 = vsyncpa [#allocation3], 1
    %396 = vsyncpa [#allocation7], 1
    %397 = vsyncpa [#allocation4], 1
    %398 = vsyncpa [#allocation11], 1
    %399 = vsyncpa [#allocation5], 1

</llo_original>
